<compile_context>
chip_gen: v6e
topology: v6e:2x2x1
jax: 0.10.0
libtpu: 0.0.40
codegen_flags: <defaults>
</compile_context>

<pallas_src>
import functools
import math

import jax
import jax.numpy as jnp
from jax.experimental import pallas as pl
from jax.experimental.pallas import tpu as pltpu

LANE = 128
SUBLANE = 8


def _round_up(x, m):
    return (x + m - 1) // m * m


def _pad2d(a, rows, cols):
    r, c = a.shape
    if r == rows and c == cols:
        return a
    return jnp.pad(a, ((0, rows - r), (0, cols - c)))


# ---------------------------------------------------------------------------
# Fused kernel: one batch tile per grid step, all layers unrolled in-body.
# refs = (x, in_w, in_b, [hid_w_i, hid_b_i]*, out_w, out_b, out)
# ---------------------------------------------------------------------------
def _mlp_kernel(*refs, n_hid, mode, h_pad):
    x_ref = refs[0]
    w_refs = refs[1:-1]
    out_ref = refs[-1]

    compute_dtype = w_refs[0].dtype          # f32 or bf16 (storage dtype of weights)

    x = x_ref[...].astype(compute_dtype)
    # Input layer + ReLU (f32 accumulation on the MXU).
    h = jnp.dot(x, w_refs[0][...], preferred_element_type=jnp.float32)
    h = jnp.maximum(h + w_refs[1][...], 0.0)
    # Hidden layers (statically unrolled; n_hid is small).
    for i in range(n_hid):
        w = w_refs[2 + 2 * i][...]
        b = w_refs[3 + 2 * i][...]
        h = jnp.maximum(
            jnp.dot(h.astype(compute_dtype), w, preferred_element_type=jnp.float32) + b,
            0.0)
    # Output layer.
    y = (jnp.dot(h.astype(compute_dtype), w_refs[-2][...],
                 preferred_element_type=jnp.float32) + w_refs[-1][...])

    if mode == "normal":
        out_ref[...] = jax.nn.sigmoid(y).astype(out_ref.dtype)
    else:
        # Single concatenated lane-dense output: [:h_pad] = hidden, [h_pad:] = logits.
        out_ref[:, :h_pad] = h.astype(out_ref.dtype)
        out_ref[:, h_pad:] = y.astype(out_ref.dtype)


# ---------------------------------------------------------------------------
# One-time parameter preparation (padding + optional bf16 cast), hoisted out
# of the per-call path.
# ---------------------------------------------------------------------------
def prepare_params(params, param_dtype=jnp.float32):
    Din = params["in_w"].shape[0]
    H = params["in_w"].shape[1]
    Dout = params["out_w"].shape[1]
    H_p = _round_up(H, LANE)
    Dout_p = _round_up(Dout, LANE)

    # Padded weight columns AND padded biases are zero, so padded hidden lanes
    # stay exactly zero through every ReLU layer.
    flat = [
        _pad2d(params["in_w"], Din, H_p).astype(param_dtype),   # no K-dim padding
        _pad2d(params["in_b"], 1, H_p).astype(jnp.float32),
    ]
    for w, b in params["hid"]:
        flat.append(_pad2d(w, H_p, H_p).astype(param_dtype))
        flat.append(_pad2d(b, 1, H_p).astype(jnp.float32))
    flat.append(_pad2d(params["out_w"], H_p, Dout_p).astype(param_dtype))
    flat.append(_pad2d(params["out_b"], 1, Dout_p).astype(jnp.float32))
    return tuple(flat)


@functools.partial(jax.jit,
                   static_argnames=("hidden_dim", "output_dim", "mode", "tile_b"))
def nn_forward(prepared, x, *, hidden_dim, output_dim, mode="normal", tile_b=1024):
    """Matches NN.forward with dropout=None (eval / no dropout)."""
    # TODO(synk): dropout (training mode) not implemented; module built with dropout=None.
    flat_w = prepared
    n_hid = (len(flat_w) - 4) // 2
    B, Din = x.shape
    H_p = flat_w[0].shape[1]
    Dout_p = flat_w[-1].shape[1]

    # Batch tile: multiple of 8 sublanes, no over-padding of the batch (Pallas
    # handles the ragged last block), and at least 2 tiles when B allows it so
    # the parallel axis can shard across v7x's two TensorCores.
    tile_b = max(SUBLANE, _round_up(min(tile_b, B), SUBLANE))
    tile_b = min(tile_b, max(_round_up(pl.cdiv(B, 2), SUBLANE), SUBLANE))
    grid = (pl.cdiv(B, tile_b),)

    in_specs = [pl.BlockSpec((tile_b, Din), lambda i: (i, 0))]      # Din = full dim, no pad
    for a in flat_w:
        # Full-array blocks with constant index_map -> weights stay VMEM-resident.
        in_specs.append(pl.BlockSpec(a.shape, lambda i: (0, 0)))

    if mode == "normal":
        out_cols = Dout_p
        transcendentals = B * Dout_p
    else:
        out_cols = H_p + Dout_p
        transcendentals = 0
    out_shape = jax.ShapeDtypeStruct((B, out_cols), jnp.float32)
    out_specs = pl.BlockSpec((tile_b, out_cols), lambda i: (i, 0))

    # Cost estimate + tight VMEM limit (actual footprint x ~2 headroom).
    weight_bytes = sum(int(a.size) * a.dtype.itemsize for a in flat_w)
    flops = 2 * B * (Din * H_p + n_hid * H_p * H_p + H_p * Dout_p)
    bytes_accessed = int(x.size * x.dtype.itemsize + weight_bytes + B * out_cols * 4)

    x_tile_bytes = tile_b * Din * x.dtype.itemsize
    out_tile_bytes = tile_b * out_cols * 4
    hidden_tmp_bytes = 2 * tile_b * H_p * 4
    footprint = weight_bytes + 2 * (x_tile_bytes + out_tile_bytes) + hidden_tmp_bytes
    vmem_limit = int(min(64 << 20, max(8 << 20, 2 * footprint)))

    kernel = functools.partial(_mlp_kernel, n_hid=n_hid, mode=mode, h_pad=H_p)
    out = pl.pallas_call(
        kernel,
        out_shape=out_shape,
        grid=grid,
        in_specs=in_specs,
        out_specs=out_specs,
        compiler_params=pltpu.CompilerParams(
            dimension_semantics=("parallel",),
            vmem_limit_bytes=vmem_limit,
        ),
        cost_estimate=pl.CostEstimate(
            flops=flops,
            transcendentals=transcendentals,
            bytes_accessed=bytes_accessed,
        ),
    )(x, *flat_w)

    if mode == "normal":
        return out[:, :output_dim]
    return out[:, :hidden_dim], out[:, H_p:H_p + output_dim]


# ---------------------------------------------------------------------------
# Deterministic parameter initialization (mirrors NN.__init__).
# ---------------------------------------------------------------------------
def _kaiming_uniform_relu(key, fan_in, fan_out):
    # PyTorch kaiming_uniform_(nonlinearity='relu'): bound = sqrt(2)*sqrt(3/fan_in)
    bound = math.sqrt(6.0 / fan_in)
    return jax.random.uniform(key, (fan_in, fan_out), jnp.float32, -bound, bound)


def _default_linear_weight(key, fan_in, fan_out):
    bound = 1.0 / math.sqrt(fan_in)
    return jax.random.uniform(key, (fan_in, fan_out), jnp.float32, -bound, bound)


def _default_bias(key, fan_in, fan_out):
    bound = 1.0 / math.sqrt(fan_in)
    return jax.random.uniform(key, (1, fan_out), jnp.float32, -bound, bound)


def init_nn_params(key, input_dim, hidden_dim, output_dim, n_layer):
    n_hid = n_layer - 2
    keys = jax.random.split(key, 2 * (n_hid + 2))
    ki = iter(range(len(keys)))
    params = {}
    params["in_w"] = _kaiming_uniform_relu(keys[next(ki)], input_dim, hidden_dim)
    params["in_b"] = _default_bias(keys[next(ki)], input_dim, hidden_dim)
    params["hid"] = []
    for _ in range(n_hid):
        w = _kaiming_uniform_relu(keys[next(ki)], hidden_dim, hidden_dim)
        b = _default_bias(keys[next(ki)], hidden_dim, hidden_dim)
        params["hid"].append((w, b))
    params["out_w"] = _default_linear_weight(keys[next(ki)], hidden_dim, output_dim)
    params["out_b"] = _default_bias(keys[next(ki)], hidden_dim, output_dim)
    return params


# Pure-JAX reference for correctness checking.
def nn_forward_ref(params, x, mode="normal"):
    hp = jax.lax.Precision.HIGHEST
    h = jax.nn.relu(jnp.dot(x, params["in_w"], precision=hp) + params["in_b"])
    for w, b in params["hid"]:
        h = jax.nn.relu(jnp.dot(h, w, precision=hp) + b)
    y = jnp.dot(h, params["out_w"], precision=hp) + params["out_b"]
    if mode == "normal":
        return jax.nn.sigmoid(y)
    return h, y


if __name__ == "__main__":
    input_dim, hidden_dim, output_dim, n_layer = 16, 32, 8, 4  # n_hid = 2
    batch = 8

    key = jax.random.PRNGKey(0)
    pkey, xkey = jax.random.split(key)
    params = init_nn_params(pkey, input_dim, hidden_dim, output_dim, n_layer)
    x = jax.random.normal(xkey, (batch, input_dim), jnp.float32)

    prepared = prepare_params(params)                      # pad/cast once, outside jit

    # mode='normal' path
    y = jax.block_until_ready(
        nn_forward(prepared, x, hidden_dim=hidden_dim, output_dim=output_dim,
                   mode="normal"))
    assert y.shape == (batch, output_dim)
    assert bool(jnp.all((y >= 0.0) & (y <= 1.0)))
    y_ref = nn_forward_ref(params, x, mode="normal")
    assert bool(jnp.allclose(y, y_ref, atol=2e-3, rtol=2e-3))

    # alternate (embedding) mode path
    x_in, x_out = nn_forward(prepared, x, hidden_dim=hidden_dim,
                             output_dim=output_dim, mode="embed")
    jax.block_until_ready(x_in)
    jax.block_until_ready(x_out)
    assert x_in.shape == (batch, hidden_dim)
    assert x_out.shape == (batch, output_dim)
    h_ref, o_ref = nn_forward_ref(params, x, mode="embed")
    assert bool(jnp.allclose(x_in, h_ref, atol=2e-3, rtol=2e-3))
    assert bool(jnp.allclose(x_out, o_ref, atol=2e-3, rtol=2e-3))

    # larger batch: exercises the adaptive tile (>=2 tiles) and the ragged last block.
    x_big = jax.random.normal(jax.random.PRNGKey(1), (300, input_dim), jnp.float32)
    y_big = jax.block_until_ready(
        nn_forward(prepared, x_big, hidden_dim=hidden_dim, output_dim=output_dim,
                   mode="normal"))
    assert y_big.shape == (300, output_dim)
    y_big_ref = nn_forward_ref(params, x_big, mode="normal")
    assert bool(jnp.allclose(y_big, y_big_ref, atol=2e-3, rtol=2e-3))

    # optional bf16 weight storage (halves weight HBM/VMEM bytes, f32 accumulation).
    prepared_bf16 = prepare_params(params, jnp.bfloat16)
    y_bf16 = jax.block_until_ready(
        nn_forward(prepared_bf16, x_big, hidden_dim=hidden_dim,
                   output_dim=output_dim, mode="normal"))
    assert y_bf16.shape == (300, output_dim)
    assert bool(jnp.allclose(y_bf16, y_big_ref, atol=5e-2, rtol=5e-2))

    print("KERNEL_OK")
</pallas_src>

<mosaic_0001>
module attributes {stable_mosaic.version = 11 : i64} {
  func.func @_mlp_kernel(%arg0: i32, %arg1: memref<8x16xf32, #tpu.memory_space<vmem>>, %arg2: memref<16x128xf32, #tpu.memory_space<vmem>>, %arg3: memref<1x128xf32, #tpu.memory_space<vmem>>, %arg4: memref<128x128xf32, #tpu.memory_space<vmem>>, %arg5: memref<1x128xf32, #tpu.memory_space<vmem>>, %arg6: memref<128x128xf32, #tpu.memory_space<vmem>>, %arg7: memref<1x128xf32, #tpu.memory_space<vmem>>, %arg8: memref<128x128xf32, #tpu.memory_space<vmem>>, %arg9: memref<1x128xf32, #tpu.memory_space<vmem>>, %arg10: memref<8x128xf32, #tpu.memory_space<vmem>>) attributes {dimension_semantics = [#tpu.dimension_semantics<parallel>], iteration_bounds = array<i64: 1>, scalar_prefetch = 0 : i64, scratch_operands = 0 : i64, tpu.core_type = #tpu.core_type<tc>, window_params = [{transform_indices = @transform_0, window_bounds = array<i64: 8, 16>}, {pipeline_mode = #tpu.pipeline_mode<synchronous>, transform_indices = @transform_1, window_bounds = array<i64: 16, 128>}, {pipeline_mode = #tpu.pipeline_mode<synchronous>, transform_indices = @transform_2, window_bounds = array<i64: 1, 128>}, {pipeline_mode = #tpu.pipeline_mode<synchronous>, transform_indices = @transform_3, window_bounds = array<i64: 128, 128>}, {pipeline_mode = #tpu.pipeline_mode<synchronous>, transform_indices = @transform_4, window_bounds = array<i64: 1, 128>}, {pipeline_mode = #tpu.pipeline_mode<synchronous>, transform_indices = @transform_5, window_bounds = array<i64: 128, 128>}, {pipeline_mode = #tpu.pipeline_mode<synchronous>, transform_indices = @transform_6, window_bounds = array<i64: 1, 128>}, {pipeline_mode = #tpu.pipeline_mode<synchronous>, transform_indices = @transform_7, window_bounds = array<i64: 128, 128>}, {pipeline_mode = #tpu.pipeline_mode<synchronous>, transform_indices = @transform_8, window_bounds = array<i64: 1, 128>}, {transform_indices = @transform_9, window_bounds = array<i64: 8, 128>}]} {
    %c0 = arith.constant 0 : index
    %c0_0 = arith.constant 0 : index
    %0 = vector.load %arg1[%c0, %c0_0] : memref<8x16xf32, #tpu.memory_space<vmem>>, vector<8x16xf32>
    %c0_1 = arith.constant 0 : index
    %c0_2 = arith.constant 0 : index
    %1 = vector.load %arg2[%c0_1, %c0_2] : memref<16x128xf32, #tpu.memory_space<vmem>>, vector<16x128xf32>
    %cst = arith.constant dense<0.000000e+00> : vector<8x128xf32>
    %2 = tpu.matmul %0, %1, %cst {dimension_numbers = #tpu.dot_dimension_numbers<[1], [0], [0], [1], [0, 0, 1, 1], [], []>} : vector<8x16xf32>, vector<16x128xf32>, vector<8x128xf32> -> vector<8x128xf32>
    %c0_3 = arith.constant 0 : index
    %c0_4 = arith.constant 0 : index
    %3 = vector.load %arg3[%c0_3, %c0_4] : memref<1x128xf32, #tpu.memory_space<vmem>>, vector<1x128xf32>
    %4 = vector.broadcast %3 : vector<1x128xf32> to vector<8x128xf32>
    %5 = arith.addf %2, %4 : vector<8x128xf32>
    %cst_5 = arith.constant 0.000000e+00 : f32
    %6 = vector.broadcast %cst_5 : f32 to vector<8x128xf32>
    %7 = arith.maximumf %5, %6 : vector<8x128xf32>
    %c0_6 = arith.constant 0 : index
    %c0_7 = arith.constant 0 : index
    %8 = vector.load %arg4[%c0_6, %c0_7] : memref<128x128xf32, #tpu.memory_space<vmem>>, vector<128x128xf32>
    %c0_8 = arith.constant 0 : index
    %c0_9 = arith.constant 0 : index
    %9 = vector.load %arg5[%c0_8, %c0_9] : memref<1x128xf32, #tpu.memory_space<vmem>>, vector<1x128xf32>
    %cst_10 = arith.constant dense<0.000000e+00> : vector<8x128xf32>
    %10 = tpu.matmul %7, %8, %cst_10 {dimension_numbers = #tpu.dot_dimension_numbers<[1], [0], [0], [1], [0, 0, 1, 1], [], []>} : vector<8x128xf32>, vector<128x128xf32>, vector<8x128xf32> -> vector<8x128xf32>
    %11 = vector.broadcast %9 : vector<1x128xf32> to vector<8x128xf32>
    %12 = arith.addf %10, %11 : vector<8x128xf32>
    %cst_11 = arith.constant 0.000000e+00 : f32
    %13 = vector.broadcast %cst_11 : f32 to vector<8x128xf32>
    %14 = arith.maximumf %12, %13 : vector<8x128xf32>
    %c0_12 = arith.constant 0 : index
    %c0_13 = arith.constant 0 : index
    %15 = vector.load %arg6[%c0_12, %c0_13] : memref<128x128xf32, #tpu.memory_space<vmem>>, vector<128x128xf32>
    %c0_14 = arith.constant 0 : index
    %c0_15 = arith.constant 0 : index
    %16 = vector.load %arg7[%c0_14, %c0_15] : memref<1x128xf32, #tpu.memory_space<vmem>>, vector<1x128xf32>
    %cst_16 = arith.constant dense<0.000000e+00> : vector<8x128xf32>
    %17 = tpu.matmul %14, %15, %cst_16 {dimension_numbers = #tpu.dot_dimension_numbers<[1], [0], [0], [1], [0, 0, 1, 1], [], []>} : vector<8x128xf32>, vector<128x128xf32>, vector<8x128xf32> -> vector<8x128xf32>
    %18 = vector.broadcast %16 : vector<1x128xf32> to vector<8x128xf32>
    %19 = arith.addf %17, %18 : vector<8x128xf32>
    %cst_17 = arith.constant 0.000000e+00 : f32
    %20 = vector.broadcast %cst_17 : f32 to vector<8x128xf32>
    %21 = arith.maximumf %19, %20 : vector<8x128xf32>
    %c0_18 = arith.constant 0 : index
    %c0_19 = arith.constant 0 : index
    %22 = vector.load %arg8[%c0_18, %c0_19] : memref<128x128xf32, #tpu.memory_space<vmem>>, vector<128x128xf32>
    %cst_20 = arith.constant dense<0.000000e+00> : vector<8x128xf32>
    %23 = tpu.matmul %21, %22, %cst_20 {dimension_numbers = #tpu.dot_dimension_numbers<[1], [0], [0], [1], [0, 0, 1, 1], [], []>} : vector<8x128xf32>, vector<128x128xf32>, vector<8x128xf32> -> vector<8x128xf32>
    %c0_21 = arith.constant 0 : index
    %c0_22 = arith.constant 0 : index
    %24 = vector.load %arg9[%c0_21, %c0_22] : memref<1x128xf32, #tpu.memory_space<vmem>>, vector<1x128xf32>
    %25 = vector.broadcast %24 : vector<1x128xf32> to vector<8x128xf32>
    %26 = arith.addf %23, %25 : vector<8x128xf32>
    %27 = arith.negf %26 : vector<8x128xf32>
    %28 = math.exp %27 : vector<8x128xf32>
    %cst_23 = arith.constant 1.000000e+00 : f32
    %29 = vector.broadcast %cst_23 : f32 to vector<8x128xf32>
    %30 = arith.addf %29, %28 : vector<8x128xf32>
    %31 = arith.divf %29, %30 : vector<8x128xf32>
    %c0_24 = arith.constant 0 : index
    %c0_25 = arith.constant 0 : index
    %32 = vector.load %arg10[%c0_24, %c0_25] : memref<8x128xf32, #tpu.memory_space<vmem>>, vector<8x128xf32>
    tpu.vector_store %arg10[%c0_24, %c0_25], %31 {strides = array<i32>} : memref<8x128xf32, #tpu.memory_space<vmem>>, vector<8x128xf32>,
    return
  }
  func.func @transform_0(%arg0: i32) -> (i32, i32) {
    %c0_i32 = arith.constant 0 : i32
    %c0_i32_0 = arith.constant 0 : i32
    return %arg0, %c0_i32 : i32, i32
  }
  func.func @transform_1(%arg0: i32) -> (i32, i32) {
    %c0_i32 = arith.constant 0 : i32
    %c0_i32_0 = arith.constant 0 : i32
    %c0_i32_1 = arith.constant 0 : i32
    return %c0_i32, %c0_i32_0 : i32, i32
  }
  func.func @transform_2(%arg0: i32) -> (i32, i32) {
    %c0_i32 = arith.constant 0 : i32
    %c0_i32_0 = arith.constant 0 : i32
    %c0_i32_1 = arith.constant 0 : i32
    return %c0_i32, %c0_i32_0 : i32, i32
  }
  func.func @transform_3(%arg0: i32) -> (i32, i32) {
    %c0_i32 = arith.constant 0 : i32
    %c0_i32_0 = arith.constant 0 : i32
    %c0_i32_1 = arith.constant 0 : i32
    return %c0_i32, %c0_i32_0 : i32, i32
  }
  func.func @transform_4(%arg0: i32) -> (i32, i32) {
    %c0_i32 = arith.constant 0 : i32
    %c0_i32_0 = arith.constant 0 : i32
    %c0_i32_1 = arith.constant 0 : i32
    return %c0_i32, %c0_i32_0 : i32, i32
  }
  func.func @transform_5(%arg0: i32) -> (i32, i32) {
    %c0_i32 = arith.constant 0 : i32
    %c0_i32_0 = arith.constant 0 : i32
    %c0_i32_1 = arith.constant 0 : i32
    return %c0_i32, %c0_i32_0 : i32, i32
  }
  func.func @transform_6(%arg0: i32) -> (i32, i32) {
    %c0_i32 = arith.constant 0 : i32
    %c0_i32_0 = arith.constant 0 : i32
    %c0_i32_1 = arith.constant 0 : i32
    return %c0_i32, %c0_i32_0 : i32, i32
  }
  func.func @transform_7(%arg0: i32) -> (i32, i32) {
    %c0_i32 = arith.constant 0 : i32
    %c0_i32_0 = arith.constant 0 : i32
    %c0_i32_1 = arith.constant 0 : i32
    return %c0_i32, %c0_i32_0 : i32, i32
  }
  func.func @transform_8(%arg0: i32) -> (i32, i32) {
    %c0_i32 = arith.constant 0 : i32
    %c0_i32_0 = arith.constant 0 : i32
    %c0_i32_1 = arith.constant 0 : i32
    return %c0_i32, %c0_i32_0 : i32, i32
  }
  func.func @transform_9(%arg0: i32) -> (i32, i32) {
    %c0_i32 = arith.constant 0 : i32
    %c0_i32_0 = arith.constant 0 : i32
    return %arg0, %c0_i32 : i32, i32
  }
}

</mosaic_0001>

<llo_original>
// kernel: nn_forward.1
$region0: #{nn_forward.1}
  #allocation0 [shape = 'u32[]', space=smem, size = 0x4, offset = 0x4, fixed_abs, tag = 'smem constant byte address 0x4 - core index']
  #allocation1 [shape = 'u32[144,128]{1,0:T(1,128)}', space=vmem, size = 0x12000, scoped, tag = 'internal scratch']
  %s0 = inlined_call_operand.vmem [shape: f32[8,16], index: 0, kind: input, shape index: {}]
  %s1 = inlined_call_operand.hbm [shape: f32[16,128], index: 1, kind: input, shape index: {}]
  %s2 = inlined_call_operand.vmem [shape: f32[1,128], index: 2, kind: input, shape index: {}]
  %s3 = inlined_call_operand.hbm [shape: f32[128,128], index: 3, kind: input, shape index: {}]
  %s4 = inlined_call_operand.vmem [shape: f32[1,128], index: 4, kind: input, shape index: {}]
  %s5 = inlined_call_operand.hbm [shape: f32[128,128], index: 5, kind: input, shape index: {}]
  %s6 = inlined_call_operand.vmem [shape: f32[1,128], index: 6, kind: input, shape index: {}]
  %s7 = inlined_call_operand.hbm [shape: f32[128,128], index: 7, kind: input, shape index: {}]
  %s8 = inlined_call_operand.vmem [shape: f32[1,128], index: 8, kind: input, shape index: {}]
  %s9 = inlined_call_operand.hbm [shape: f32[8,128], index: 9, kind: output, shape index: {}]
  %s10 = sld [smem:[#allocation0]]
  $region62: #{nn_forward.1} parent=0
    _
  %s12 = ssub.s32 1, %s10
  %s13 = scalar_select 0, %s12, %s10
  $region1: #{nn_forward.1} parent=0
    #allocation2 [shape = 'u8[8192]{0}', space=vmem, size = 0x2000, scoped, tag = 'input window, operand 1, single buffered']
    #allocation3 [shape = 's32[1]{0}', space=sflag, size = 0x4, scoped, tag = 'scoped memory for nn_forward.1']
    #allocation4 [shape = 's32[1]{0}', space=sflag, size = 0x4, scoped, tag = 'scoped memory for nn_forward.1']
    #allocation5 [shape = 'u8[65536]{0}', space=vmem, size = 0x10000, scoped, tag = 'input window, operand 3, single buffered']
    #allocation6 [shape = 's32[1]{0}', space=sflag, size = 0x4, scoped, tag = 'scoped memory for nn_forward.1']
    #allocation7 [shape = 'u8[65536]{0}', space=vmem, size = 0x10000, scoped, tag = 'input window, operand 5, single buffered']
    #allocation8 [shape = 'u8[65536]{0}', space=vmem, size = 0x10000, scoped, tag = 'input window, operand 7, single buffered']
    #allocation9 [shape = 's32[1]{0}', space=sflag, size = 0x4, scoped, tag = 'scoped memory for nn_forward.1']
    #allocation10 [shape = 'u8[4096]{0}', space=vmem, size = 0x1000, scoped, tag = 'output window, operand 0, single buffered']
    %14 = vsyncpa [#allocation3], 0
    %15 = vsyncpa [#allocation6], 0
    %16 = vsyncpa [#allocation9], 0
    %17 = vsyncpa [#allocation4], 0
    // Predicated region
    $region2: #{nn_forward.1} parent=1 // pred_check
      _
    $region3: #{nn_forward.1} parent=1 // pred_check_branch
      %19 = sbr.rel (0) target = $region5
    $region4: #{nn_forward.1} parent=1 // pred_region
      _
    $region5: #{nn_forward.1} parent=1 // pred_fallthru
      _
    // Predicated region
    $region6: #{nn_forward.1} parent=1 // pred_check
      _
    $region7: #{nn_forward.1} parent=1 // pred_check_branch
      %21 = sbr.rel (0) target = $region9
    $region8: #{nn_forward.1} parent=1 // pred_region
      %s23 = ssub.s32 256, 256
      %24 = vsyncadd [#allocation3], %s23
      %s25 = sshll.u32 [#allocation2], 4
      %s26 = int_to_ptr.vmem [resolvable:$true] %s25
      %31 = dma.hbm_to_vmem [thread:$0]  %s1, 256, %s26, [#allocation3], 128, 128, 8
    $region9: #{nn_forward.1} parent=1 // pred_fallthru
      _
    // Predicated region
    $region10: #{nn_forward.1} parent=1 // pred_check
      _
    $region11: #{nn_forward.1} parent=1 // pred_check_branch
      %33 = sbr.rel (0) target = $region13
    $region12: #{nn_forward.1} parent=1 // pred_region
      _
    $region13: #{nn_forward.1} parent=1 // pred_fallthru
      _
    // Predicated region
    $region14: #{nn_forward.1} parent=1 // pred_check
      _
    $region15: #{nn_forward.1} parent=1 // pred_check_branch
      %35 = sbr.rel (0) target = $region17
    $region16: #{nn_forward.1} parent=1 // pred_region
      %s37 = ssub.s32 2048, 2048
      %38 = vsyncadd [#allocation6], %s37
      %s39 = sshll.u32 [#allocation5], 4
      %s40 = int_to_ptr.vmem [resolvable:$true] %s39
      %45 = dma.hbm_to_vmem [thread:$0]  %s3, 2048, %s40, [#allocation6], 128, 128, 8
    $region17: #{nn_forward.1} parent=1 // pred_fallthru
      _
    // Predicated region
    $region18: #{nn_forward.1} parent=1 // pred_check
      _
    $region19: #{nn_forward.1} parent=1 // pred_check_branch
      %47 = sbr.rel (0) target = $region21
    $region20: #{nn_forward.1} parent=1 // pred_region
      _
    $region21: #{nn_forward.1} parent=1 // pred_fallthru
      _
    // Predicated region
    $region22: #{nn_forward.1} parent=1 // pred_check
      _
    $region23: #{nn_forward.1} parent=1 // pred_check_branch
      %49 = sbr.rel (0) target = $region25
    $region24: #{nn_forward.1} parent=1 // pred_region
      %s51 = ssub.s32 2048, 2048
      %52 = vsyncadd [#allocation6], %s51
      %s53 = sshll.u32 [#allocation7], 4
      %s54 = int_to_ptr.vmem [resolvable:$true] %s53
      %59 = dma.hbm_to_vmem [thread:$0]  %s5, 2048, %s54, [#allocation6], 128, 128, 8
    $region25: #{nn_forward.1} parent=1 // pred_fallthru
      _
    // Predicated region
    $region26: #{nn_forward.1} parent=1 // pred_check
      _
    $region27: #{nn_forward.1} parent=1 // pred_check_branch
      %61 = sbr.rel (0) target = $region29
    $region28: #{nn_forward.1} parent=1 // pred_region
      _
    $region29: #{nn_forward.1} parent=1 // pred_fallthru
      _
    // Predicated region
    $region30: #{nn_forward.1} parent=1 // pred_check
      _
    $region31: #{nn_forward.1} parent=1 // pred_check_branch
      %63 = sbr.rel (0) target = $region33
    $region32: #{nn_forward.1} parent=1 // pred_region
      %s65 = ssub.s32 2048, 2048
      %66 = vsyncadd [#allocation9], %s65
      %s67 = sshll.u32 [#allocation8], 4
      %s68 = int_to_ptr.vmem [resolvable:$true] %s67
      %73 = dma.hbm_to_vmem [thread:$0]  %s7, 2048, %s68, [#allocation9], 128, 128, 8
    $region33: #{nn_forward.1} parent=1 // pred_fallthru
      _
    // Predicated region
    $region34: #{nn_forward.1} parent=1 // pred_check
      _
    $region35: #{nn_forward.1} parent=1 // pred_check_branch
      %75 = sbr.rel (0) target = $region37
    $region36: #{nn_forward.1} parent=1 // pred_region
      _
    $region37: #{nn_forward.1} parent=1 // pred_fallthru
      _
    // Predicated region
    $region38: #{nn_forward.1} parent=1 // pred_check
      _
    $region39: #{nn_forward.1} parent=1 // pred_check_branch
      %77 = sbr.rel (0) target = $region41
    $region40: #{nn_forward.1} parent=1 // pred_region
      %78 = dma.done [#allocation3], 256
    $region41: #{nn_forward.1} parent=1 // pred_fallthru
      _
    // Predicated region
    $region42: #{nn_forward.1} parent=1 // pred_check
      _
    $region43: #{nn_forward.1} parent=1 // pred_check_branch
      %80 = sbr.rel (0) target = $region45
    $region44: #{nn_forward.1} parent=1 // pred_region
      %81 = dma.done [#allocation6], 2048
    $region45: #{nn_forward.1} parent=1 // pred_fallthru
      _
    // Predicated region
    $region46: #{nn_forward.1} parent=1 // pred_check
      _
    $region47: #{nn_forward.1} parent=1 // pred_check_branch
      %83 = sbr.rel (0) target = $region49
    $region48: #{nn_forward.1} parent=1 // pred_region
      %84 = dma.done [#allocation6], 2048
    $region49: #{nn_forward.1} parent=1 // pred_fallthru
      _
    // Predicated region
    $region50: #{nn_forward.1} parent=1 // pred_check
      _
    $region51: #{nn_forward.1} parent=1 // pred_check_branch
      %86 = sbr.rel (0) target = $region53
    $region52: #{nn_forward.1} parent=1 // pred_region
      %87 = dma.done [#allocation9], 2048
    $region53: #{nn_forward.1} parent=1 // pred_fallthru
      _
    %v88 = vld [vmem:[%s0] sm:$0xff]
    %v89 = vld [vmem:[#allocation2] sm:$0xff]
    %v90 = vld [vmem:[#allocation2 + $0x8] sm:$0xff]
    %v91 = vld [vmem:[%s2] sm:$0x1]
    %v93 = vlaneseq
    %v94 = vshrl.u32 %v93, 7
    %v95 = vsub.s32 0, %v94
    %v96 = vrot.slane %v91, %v95
    %vm98 = vcmask 130048
    %v100 = vsel %vm98, %v88, 0
    %102 = vmatprep.subr.mxu0 0.0
    %103 = vmatpush1.msra.mxu0 0.0
    %104 = vmatprep.subr.mxu0 0.0
    %105 = vmatpush1.msra.mxu0 0.0
    %106 = vmatprep.subr.mxu0 0.0
    %107 = vmatpush1.msra.mxu0 0.0
    %108 = vmatprep.subr.mxu0 0.0
    %109 = vmatpush1.msra.mxu0 0.0
    %110 = vmatprep.subr.mxu0 0.0
    %111 = vmatpush1.msra.mxu0 0.0
    %112 = vmatprep.subr.mxu0 0.0
    %113 = vmatpush1.msra.mxu0 0.0
    %114 = vmatprep.subr.mxu0 0.0
    %115 = vmatpush1.msra.mxu0 0.0
    %116 = vmatprep.subr.mxu0 0.0
    %117 = vmatpush1.msra.mxu0 0.0
    %118 = vmatprep.subr.mxu0 0.0
    %119 = vmatpush1.msra.mxu0 0.0
    %120 = vmatprep.subr.mxu0 0.0
    %121 = vmatpush1.msra.mxu0 0.0
    %122 = vmatprep.subr.mxu0 0.0
    %123 = vmatpush1.msra.mxu0 0.0
    %124 = vmatprep.subr.mxu0 0.0
    %125 = vmatpush1.msra.mxu0 0.0
    %126 = vmatprep.subr.mxu0 0.0
    %127 = vmatpush1.msra.mxu0 0.0
    %128 = vmatprep.subr.mxu0 0.0
    %129 = vmatpush1.msra.mxu0 0.0
    %130 = vmatprep.subr.mxu0 0.0
    %131 = vmatpush1.msra.mxu0 %v90
    %132 = vmatprep.subr.mxu0 0.0
    %133 = vmatpush1.msra.mxu0 %v89
    %134 = vmatprep.subr.mxu0 0.0
    %135 = vmatpush2.msra.mxu0 0.0
    %136 = vmatprep.subr.mxu0 0.0
    %137 = vmatpush2.msra.mxu0 0.0
    %138 = vmatprep.subr.mxu0 0.0
    %139 = vmatpush2.msra.mxu0 0.0
    %140 = vmatprep.subr.mxu0 0.0
    %141 = vmatpush2.msra.mxu0 0.0
    %142 = vmatprep.subr.mxu0 0.0
    %143 = vmatpush2.msra.mxu0 0.0
    %144 = vmatprep.subr.mxu0 0.0
    %145 = vmatpush2.msra.mxu0 0.0
    %146 = vmatprep.subr.mxu0 0.0
    %147 = vmatpush2.msra.mxu0 0.0
    %148 = vmatprep.subr.mxu0 0.0
    %149 = vmatpush2.msra.mxu0 0.0
    %150 = vmatprep.subr.mxu0 0.0
    %151 = vmatpush2.msra.mxu0 0.0
    %152 = vmatprep.subr.mxu0 0.0
    %153 = vmatpush2.msra.mxu0 0.0
    %154 = vmatprep.subr.mxu0 0.0
    %155 = vmatpush2.msra.mxu0 0.0
    %156 = vmatprep.subr.mxu0 0.0
    %157 = vmatpush2.msra.mxu0 0.0
    %158 = vmatprep.subr.mxu0 0.0
    %159 = vmatpush2.msra.mxu0 0.0
    %160 = vmatprep.subr.mxu0 0.0
    %161 = vmatpush2.msra.mxu0 0.0
    %162 = vmatprep.subr.mxu0 0.0
    %163 = vmatpush2.msra.mxu0 0.0
    %164 = vmatprep.subr.mxu0 0.0
    %165 = vmatpush2.msra.mxu0 0.0
    %166 = vmatprep.mubr.f32.mxu0 0.0
    %167 = vmatmul.mubr.f32.gmra.mxu0 %v100
    %v168 = vpop.f32.mrf.mxu0
    %v169 = vadd.f32 %v96, %v168
    %v170 = vpop.f32.mrf.mxu0
    %171 = vdwg.mxu0
    %v172 = vmax.f32 %v169, 0.0
    %v173 = vld [vmem:[#allocation5] sm:$0xff]
    %v174 = vld [vmem:[#allocation5 + $0x8] sm:$0xff]
    %v175 = vld [vmem:[#allocation5 + $0x10] sm:$0xff]
    %v176 = vld [vmem:[#allocation5 + $0x18] sm:$0xff]
    %v177 = vld [vmem:[#allocation5 + $0x20] sm:$0xff]
    %v178 = vld [vmem:[#allocation5 + $0x28] sm:$0xff]
    %v179 = vld [vmem:[#allocation5 + $0x30] sm:$0xff]
    %v180 = vld [vmem:[#allocation5 + $0x38] sm:$0xff]
    %v181 = vld [vmem:[#allocation5 + $0x40] sm:$0xff]
    %v182 = vld [vmem:[#allocation5 + $0x48] sm:$0xff]
    %v183 = vld [vmem:[#allocation5 + $0x50] sm:$0xff]
    %v184 = vld [vmem:[#allocation5 + $0x58] sm:$0xff]
    %v185 = vld [vmem:[#allocation5 + $0x60] sm:$0xff]
    %v186 = vld [vmem:[#allocation5 + $0x68] sm:$0xff]
    %v187 = vld [vmem:[#allocation5 + $0x70] sm:$0xff]
    %v188 = vld [vmem:[#allocation5 + $0x78] sm:$0xff]
    %v189 = vld [vmem:[%s4] sm:$0x1]
    %v191 = vlaneseq
    %v192 = vshrl.u32 %v191, 7
    %v193 = vsub.s32 0, %v192
    %v194 = vrot.slane %v189, %v193
    %196 = vmatprep.subr.mxu0 0.0
    %197 = vmatpush1.msra.mxu0 %v188
    %198 = vmatprep.subr.mxu0 0.0
    %199 = vmatpush1.msra.mxu0 %v187
    %200 = vmatprep.subr.mxu0 0.0
    %201 = vmatpush1.msra.mxu0 %v186
    %202 = vmatprep.subr.mxu0 0.0
    %203 = vmatpush1.msra.mxu0 %v185
    %204 = vmatprep.subr.mxu0 0.0
    %205 = vmatpush1.msra.mxu0 %v184
    %206 = vmatprep.subr.mxu0 0.0
    %207 = vmatpush1.msra.mxu0 %v183
    %208 = vmatprep.subr.mxu0 0.0
    %209 = vmatpush1.msra.mxu0 %v182
    %210 = vmatprep.subr.mxu0 0.0
    %211 = vmatpush1.msra.mxu0 %v181
    %212 = vmatprep.subr.mxu0 0.0
    %213 = vmatpush1.msra.mxu0 %v180
    %214 = vmatprep.subr.mxu0 0.0
    %215 = vmatpush1.msra.mxu0 %v179
    %216 = vmatprep.subr.mxu0 0.0
    %217 = vmatpush1.msra.mxu0 %v178
    %218 = vmatprep.subr.mxu0 0.0
    %219 = vmatpush1.msra.mxu0 %v177
    %220 = vmatprep.subr.mxu0 0.0
    %221 = vmatpush1.msra.mxu0 %v176
    %222 = vmatprep.subr.mxu0 0.0
    %223 = vmatpush1.msra.mxu0 %v175
    %224 = vmatprep.subr.mxu0 0.0
    %225 = vmatpush1.msra.mxu0 %v174
    %226 = vmatprep.subr.mxu0 0.0
    %227 = vmatpush1.msra.mxu0 %v173
    %228 = vmatprep.subr.mxu0 0.0
    %229 = vmatpush2.msra.mxu0 0.0
    %230 = vmatprep.subr.mxu0 0.0
    %231 = vmatpush2.msra.mxu0 0.0
    %232 = vmatprep.subr.mxu0 0.0
    %233 = vmatpush2.msra.mxu0 0.0
    %234 = vmatprep.subr.mxu0 0.0
    %235 = vmatpush2.msra.mxu0 0.0
    %236 = vmatprep.subr.mxu0 0.0
    %237 = vmatpush2.msra.mxu0 0.0
    %238 = vmatprep.subr.mxu0 0.0
    %239 = vmatpush2.msra.mxu0 0.0
    %240 = vmatprep.subr.mxu0 0.0
    %241 = vmatpush2.msra.mxu0 0.0
    %242 = vmatprep.subr.mxu0 0.0
    %243 = vmatpush2.msra.mxu0 0.0
    %244 = vmatprep.subr.mxu0 0.0
    %245 = vmatpush2.msra.mxu0 0.0
    %246 = vmatprep.subr.mxu0 0.0
    %247 = vmatpush2.msra.mxu0 0.0
    %248 = vmatprep.subr.mxu0 0.0
    %249 = vmatpush2.msra.mxu0 0.0
    %250 = vmatprep.subr.mxu0 0.0
    %251 = vmatpush2.msra.mxu0 0.0
    %252 = vmatprep.subr.mxu0 0.0
    %253 = vmatpush2.msra.mxu0 0.0
    %254 = vmatprep.subr.mxu0 0.0
    %255 = vmatpush2.msra.mxu0 0.0
    %256 = vmatprep.subr.mxu0 0.0
    %257 = vmatpush2.msra.mxu0 0.0
    %258 = vmatprep.subr.mxu0 0.0
    %259 = vmatpush2.msra.mxu0 0.0
    %260 = vmatprep.mubr.f32.mxu0 0.0
    %261 = vmatmul.mubr.f32.gmra.mxu0 %v172
    %v262 = vpop.f32.mrf.mxu0
    %v263 = vadd.f32 %v194, %v262
    %v264 = vpop.f32.mrf.mxu0
    %265 = vdwg.mxu0
    %v266 = vmax.f32 %v263, 0.0
    %v267 = vld [vmem:[#allocation7] sm:$0xff]
    %v268 = vld [vmem:[#allocation7 + $0x8] sm:$0xff]
    %v269 = vld [vmem:[#allocation7 + $0x10] sm:$0xff]
    %v270 = vld [vmem:[#allocation7 + $0x18] sm:$0xff]
    %v271 = vld [vmem:[#allocation7 + $0x20] sm:$0xff]
    %v272 = vld [vmem:[#allocation7 + $0x28] sm:$0xff]
    %v273 = vld [vmem:[#allocation7 + $0x30] sm:$0xff]
    %v274 = vld [vmem:[#allocation7 + $0x38] sm:$0xff]
    %v275 = vld [vmem:[#allocation7 + $0x40] sm:$0xff]
    %v276 = vld [vmem:[#allocation7 + $0x48] sm:$0xff]
    %v277 = vld [vmem:[#allocation7 + $0x50] sm:$0xff]
    %v278 = vld [vmem:[#allocation7 + $0x58] sm:$0xff]
    %v279 = vld [vmem:[#allocation7 + $0x60] sm:$0xff]
    %v280 = vld [vmem:[#allocation7 + $0x68] sm:$0xff]
    %v281 = vld [vmem:[#allocation7 + $0x70] sm:$0xff]
    %v282 = vld [vmem:[#allocation7 + $0x78] sm:$0xff]
    %v283 = vld [vmem:[%s6] sm:$0x1]
    %v285 = vlaneseq
    %v286 = vshrl.u32 %v285, 7
    %v287 = vsub.s32 0, %v286
    %v288 = vrot.slane %v283, %v287
    %290 = vmatprep.subr.mxu0 0.0
    %291 = vmatpush1.msra.mxu0 %v282
    %292 = vmatprep.subr.mxu0 0.0
    %293 = vmatpush1.msra.mxu0 %v281
    %294 = vmatprep.subr.mxu0 0.0
    %295 = vmatpush1.msra.mxu0 %v280
    %296 = vmatprep.subr.mxu0 0.0
    %297 = vmatpush1.msra.mxu0 %v279
    %298 = vmatprep.subr.mxu0 0.0
    %299 = vmatpush1.msra.mxu0 %v278
    %300 = vmatprep.subr.mxu0 0.0
    %301 = vmatpush1.msra.mxu0 %v277
    %302 = vmatprep.subr.mxu0 0.0
    %303 = vmatpush1.msra.mxu0 %v276
    %304 = vmatprep.subr.mxu0 0.0
    %305 = vmatpush1.msra.mxu0 %v275
    %306 = vmatprep.subr.mxu0 0.0
    %307 = vmatpush1.msra.mxu0 %v274
    %308 = vmatprep.subr.mxu0 0.0
    %309 = vmatpush1.msra.mxu0 %v273
    %310 = vmatprep.subr.mxu0 0.0
    %311 = vmatpush1.msra.mxu0 %v272
    %312 = vmatprep.subr.mxu0 0.0
    %313 = vmatpush1.msra.mxu0 %v271
    %314 = vmatprep.subr.mxu0 0.0
    %315 = vmatpush1.msra.mxu0 %v270
    %316 = vmatprep.subr.mxu0 0.0
    %317 = vmatpush1.msra.mxu0 %v269
    %318 = vmatprep.subr.mxu0 0.0
    %319 = vmatpush1.msra.mxu0 %v268
    %320 = vmatprep.subr.mxu0 0.0
    %321 = vmatpush1.msra.mxu0 %v267
    %322 = vmatprep.subr.mxu0 0.0
    %323 = vmatpush2.msra.mxu0 0.0
    %324 = vmatprep.subr.mxu0 0.0
    %325 = vmatpush2.msra.mxu0 0.0
    %326 = vmatprep.subr.mxu0 0.0
    %327 = vmatpush2.msra.mxu0 0.0
    %328 = vmatprep.subr.mxu0 0.0
    %329 = vmatpush2.msra.mxu0 0.0
    %330 = vmatprep.subr.mxu0 0.0
    %331 = vmatpush2.msra.mxu0 0.0
    %332 = vmatprep.subr.mxu0 0.0
    %333 = vmatpush2.msra.mxu0 0.0
    %334 = vmatprep.subr.mxu0 0.0
    %335 = vmatpush2.msra.mxu0 0.0
    %336 = vmatprep.subr.mxu0 0.0
    %337 = vmatpush2.msra.mxu0 0.0
    %338 = vmatprep.subr.mxu0 0.0
    %339 = vmatpush2.msra.mxu0 0.0
    %340 = vmatprep.subr.mxu0 0.0
    %341 = vmatpush2.msra.mxu0 0.0
    %342 = vmatprep.subr.mxu0 0.0
    %343 = vmatpush2.msra.mxu0 0.0
    %344 = vmatprep.subr.mxu0 0.0
    %345 = vmatpush2.msra.mxu0 0.0
    %346 = vmatprep.subr.mxu0 0.0
    %347 = vmatpush2.msra.mxu0 0.0
    %348 = vmatprep.subr.mxu0 0.0
    %349 = vmatpush2.msra.mxu0 0.0
    %350 = vmatprep.subr.mxu0 0.0
    %351 = vmatpush2.msra.mxu0 0.0
    %352 = vmatprep.subr.mxu0 0.0
    %353 = vmatpush2.msra.mxu0 0.0
    %354 = vmatprep.mubr.f32.mxu0 0.0
    %355 = vmatmul.mubr.f32.gmra.mxu0 %v266
    %v356 = vpop.f32.mrf.mxu0
    %v357 = vadd.f32 %v288, %v356
    %v358 = vpop.f32.mrf.mxu0
    %359 = vdwg.mxu0
    %v360 = vmax.f32 %v357, 0.0
    %v361 = vld [vmem:[#allocation8] sm:$0xff]
    %v362 = vld [vmem:[#allocation8 + $0x8] sm:$0xff]
    %v363 = vld [vmem:[#allocation8 + $0x10] sm:$0xff]
    %v364 = vld [vmem:[#allocation8 + $0x18] sm:$0xff]
    %v365 = vld [vmem:[#allocation8 + $0x20] sm:$0xff]
    %v366 = vld [vmem:[#allocation8 + $0x28] sm:$0xff]
    %v367 = vld [vmem:[#allocation8 + $0x30] sm:$0xff]
    %v368 = vld [vmem:[#allocation8 + $0x38] sm:$0xff]
    %v369 = vld [vmem:[#allocation8 + $0x40] sm:$0xff]
    %v370 = vld [vmem:[#allocation8 + $0x48] sm:$0xff]
    %v371 = vld [vmem:[#allocation8 + $0x50] sm:$0xff]
    %v372 = vld [vmem:[#allocation8 + $0x58] sm:$0xff]
    %v373 = vld [vmem:[#allocation8 + $0x60] sm:$0xff]
    %v374 = vld [vmem:[#allocation8 + $0x68] sm:$0xff]
    %v375 = vld [vmem:[#allocation8 + $0x70] sm:$0xff]
    %v376 = vld [vmem:[#allocation8 + $0x78] sm:$0xff]
    %v377 = vld [vmem:[%s8] sm:$0x1]
    %v379 = vlaneseq
    %v380 = vshrl.u32 %v379, 7
    %v381 = vsub.s32 0, %v380
    %v382 = vrot.slane %v377, %v381
    %384 = vmatprep.subr.mxu0 0.0
    %385 = vmatpush1.msra.mxu0 %v376
    %386 = vmatprep.subr.mxu0 0.0
    %387 = vmatpush1.msra.mxu0 %v375
    %388 = vmatprep.subr.mxu0 0.0
    %389 = vmatpush1.msra.mxu0 %v374
    %390 = vmatprep.subr.mxu0 0.0
    %391 = vmatpush1.msra.mxu0 %v373
    %392 = vmatprep.subr.mxu0 0.0
    %393 = vmatpush1.msra.mxu0 %v372
    %394 = vmatprep.subr.mxu0 0.0
    %395 = vmatpush1.msra.mxu0 %v371
    %396 = vmatprep.subr.mxu0 0.0
    %397 = vmatpush1.msra.mxu0 %v370
    %398 = vmatprep.subr.mxu0 0.0
    %399 = vmatpush1.msra.mxu0 %v369
    %400 = vmatprep.subr.mxu0 0.0
    %401 = vmatpush1.msra.mxu0 %v368
    %402 = vmatprep.subr.mxu0 0.0
    %403 = vmatpush1.msra.mxu0 %v367
    %404 = vmatprep.subr.mxu0 0.0
    %405 = vmatpush1.msra.mxu0 %v366
    %406 = vmatprep.subr.mxu0 0.0
    %407 = vmatpush1.msra.mxu0 %v365
    %408 = vmatprep.subr.mxu0 0.0
    %409 = vmatpush1.msra.mxu0 %v364
    %410 = vmatprep.subr.mxu0 0.0
    %411 = vmatpush1.msra.mxu0 %v363
    %412 = vmatprep.subr.mxu0 0.0
    %413 = vmatpush1.msra.mxu0 %v362
    %414 = vmatprep.subr.mxu0 0.0
    %415 = vmatpush1.msra.mxu0 %v361
    %416 = vmatprep.subr.mxu0 0.0
    %417 = vmatpush2.msra.mxu0 0.0
    %418 = vmatprep.subr.mxu0 0.0
    %419 = vmatpush2.msra.mxu0 0.0
    %420 = vmatprep.subr.mxu0 0.0
    %421 = vmatpush2.msra.mxu0 0.0
    %422 = vmatprep.subr.mxu0 0.0
    %423 = vmatpush2.msra.mxu0 0.0
    %424 = vmatprep.subr.mxu0 0.0
    %425 = vmatpush2.msra.mxu0 0.0
    %426 = vmatprep.subr.mxu0 0.0
    %427 = vmatpush2.msra.mxu0 0.0
    %428 = vmatprep.subr.mxu0 0.0
    %429 = vmatpush2.msra.mxu0 0.0
    %430 = vmatprep.subr.mxu0 0.0
    %431 = vmatpush2.msra.mxu0 0.0
    %432 = vmatprep.subr.mxu0 0.0
    %433 = vmatpush2.msra.mxu0 0.0
    %434 = vmatprep.subr.mxu0 0.0
    %435 = vmatpush2.msra.mxu0 0.0
    %436 = vmatprep.subr.mxu0 0.0
    %437 = vmatpush2.msra.mxu0 0.0
    %438 = vmatprep.subr.mxu0 0.0
    %439 = vmatpush2.msra.mxu0 0.0
    %440 = vmatprep.subr.mxu0 0.0
    %441 = vmatpush2.msra.mxu0 0.0
    %442 = vmatprep.subr.mxu0 0.0
    %443 = vmatpush2.msra.mxu0 0.0
    %444 = vmatprep.subr.mxu0 0.0
    %445 = vmatpush2.msra.mxu0 0.0
    %446 = vmatprep.subr.mxu0 0.0
    %447 = vmatpush2.msra.mxu0 0.0
    %448 = vmatprep.mubr.f32.mxu0 0.0
    %449 = vmatmul.mubr.f32.gmra.mxu0 %v360
    %v450 = vpop.f32.mrf.mxu0
    %v451 = vadd.f32 %v382, %v450
    %v452 = vpop.f32.mrf.mxu0
    %453 = vdwg.mxu0
    %v454 = vxor.u32 %v451, 2147483648
    %v455 = vmul.f32 %v454, 1.442695
    %v456 = vpow.pop %v455
    %v457 = vadd.f32 %v456, 1.0
    %v458 = vrcp.pop %v457
    %v459 = vmul.f32 1.0, %v458
    %460 = vst [vmem:[#allocation10] sm:$0xff] %v459
    // Predicated region
    $region54: #{nn_forward.1} parent=1 // pred_check
      _
    $region55: #{nn_forward.1} parent=1 // pred_check_branch
      %462 = sbr.rel (0) target = $region57
    $region56: #{nn_forward.1} parent=1 // pred_region
      %s464 = ssub.s32 128, 128
      %465 = vsyncadd [#allocation4], %s464
      %s467 = sshll.u32 [#allocation10], 4
      %s468 = int_to_ptr.vmem [resolvable:$true] %s467
      %470 = dma.vmem_to_hbm [thread:$0]  %s468, 128, %s9, [#allocation4]
    $region57: #{nn_forward.1} parent=1 // pred_fallthru
      _
    // Predicated region
    $region58: #{nn_forward.1} parent=1 // pred_check
      _
    $region59: #{nn_forward.1} parent=1 // pred_check_branch
      %472 = sbr.rel (0) target = $region61
    $region60: #{nn_forward.1} parent=1 // pred_region
      %473 = dma.done [#allocation4], 128
    $region61: #{nn_forward.1} parent=1 // pred_fallthru
      _
    %474 = vsyncpa [#allocation3], 1
    %475 = vsyncpa [#allocation6], 1
    %476 = vsyncpa [#allocation9], 1
    %477 = vsyncpa [#allocation4], 1

</llo_original>
